<compile_context>
chip_gen: v6e
topology: v6e:2x2x1
jax: 0.10.0
libtpu: 0.0.40
codegen_flags: <defaults>
</compile_context>

<pallas_src>
import functools

import jax
import jax.numpy as jnp
from jax.experimental import pallas as pl
from jax.experimental.pallas import tpu as pltpu


def _round_up(v, m):
    return (v + m - 1) // m * m


def _fused_mlp_kernel(*refs, residual_flags, use_scratch):
    """Whole-MLP forward on one batch tile; all layers statically unrolled.

    refs = (x_ref, w_0..w_{L-1}, b_0..b_{L-1}, o_ref[, act_scratch])
      x_ref : (TB, K0)      input activations (VMEM block, f32)
      w_l   : (K_l, N_l)    zero-padded layer-l weight, (in, out) layout (f32 or bf16)
      b_l   : (1,  N_l)     zero-padded layer-l bias (f32)
      o_ref : (TB, N_last)  lane-padded output activations (f32)
      act_scratch : (TB, max_N) VMEM inter-layer buffer (only when the tile is large)
    """
    n_layers = len(residual_flags)
    x_ref = refs[0]
    w_refs = refs[1:1 + n_layers]
    b_refs = refs[1 + n_layers:1 + 2 * n_layers]
    o_ref = refs[1 + 2 * n_layers]
    act_ref = refs[2 + 2 * n_layers] if use_scratch else None

    act = x_ref[...]                                    # layer-0 input; no scratch copy
    for l, residual in enumerate(residual_flags):       # static unroll over layers
        w = w_refs[l][...]
        # bf16 weights -> bf16 MXU matmul; accumulation always f32.
        y = jnp.dot(act.astype(w.dtype), w, preferred_element_type=jnp.float32)
        y = y + b_refs[l][...]                          # (1, N_l) broadcasts over batch
        if residual:                                    # ResLinear path (in == out)
            y = y + act
        y = jnp.maximum(y, 0.0)                         # ReLU
        if l == n_layers - 1:
            o_ref[...] = y.astype(o_ref.dtype)
        elif use_scratch:
            n = y.shape[1]
            act_ref[:, :n] = y                          # break vreg live range via VMEM
            act = act_ref[:, :n]
        else:
            act = y                                     # small tile: carry in vregs


def pack_mlp_params(params, *, use_bf16=False):
    """One-time packing of MLP params into lane-aligned per-layer arrays.

    params: list of {"w": (in, out) f32, "b": (out,) f32, "residual": bool}
    use_bf16: store weights as bf16 for the MXU matmul (f32 accumulation kept);
              ~1e-2 relative-error trade-off vs the f32 reference.

    Call once at init and reuse the result across forward calls.
    """
    n_layers = len(params)
    in_dims = [int(p["w"].shape[0]) for p in params]
    out_dims = [int(p["w"].shape[1]) for p in params]
    for l in range(1, n_layers):
        assert in_dims[l] == out_dims[l - 1], "MLP layer dims must chain"
    residual_flags = tuple(bool(p["residual"]) for p in params)

    # Kernel-side input width of each layer:
    #   layer 0   : the true din0 (block last dim == full array dim is legal), except
    #               when layer 0 is a ResLinear with din0 % 128 != 0 (residual add
    #               needs matching padded widths) -> round up to 128.
    #   layer l>0 : previous layer's lane-padded output width.
    k0 = in_dims[0]
    if residual_flags[0] and k0 % 128 != 0:
        k0 = _round_up(k0, 128)
    k_pads = [k0] + [_round_up(o, 128) for o in out_dims[:-1]]
    n_pads = [_round_up(o, 128) for o in out_dims]

    w_dtype = jnp.bfloat16 if use_bf16 else jnp.float32
    weights, biases = [], []
    for l, p in enumerate(params):
        di, do = p["w"].shape
        w = jnp.zeros((k_pads[l], n_pads[l]), w_dtype).at[:di, :do].set(p["w"].astype(w_dtype))
        b = jnp.zeros((1, n_pads[l]), jnp.float32).at[0, :do].set(p["b"].astype(jnp.float32))
        weights.append(w)
        biases.append(b)

    return {
        "weights": tuple(weights),
        "biases": tuple(biases),
        "residual_flags": residual_flags,
        "in_dim": in_dims[0],
        "out_dim": out_dims[-1],
    }


def mlp_forward(x, packed, *, tb_max=512):
    """x: (B, in_dims[0]) f32; packed: output of pack_mlp_params."""
    B, din = x.shape
    assert din == packed["in_dim"]
    ws = packed["weights"]
    bs = packed["biases"]
    residual_flags = packed["residual_flags"]
    n_layers = len(ws)
    k0 = ws[0].shape[0]
    n_last = ws[-1].shape[1]

    # Batch tiling: sublane multiple of 8; big tiles amortize per-grid-step overhead,
    # but keep >= 2 grid steps for larger batches so both v7x TensorCores get work.
    b_pad = _round_up(B, 8)
    tb = min(tb_max, b_pad)
    if b_pad // tb < 2 and b_pad >= 16:
        tb = _round_up((b_pad + 1) // 2, 8)
    b_pad = _round_up(b_pad, tb)

    # Pad batch only (plus input features only if layer 0 forces it; see pack_mlp_params).
    x_in = x.astype(jnp.float32)
    if b_pad != B or k0 != din:
        x_in = jnp.pad(x_in, ((0, b_pad - B), (0, k0 - din)))

    # Inter-layer activations: vreg-carried for small tiles; explicit VMEM scratch for
    # large ones (64 vregs = 256 KiB -> spill territory).
    max_width = max([k0] + [w.shape[1] for w in ws])
    use_scratch = (n_layers > 1) and (tb * max_width * 4 > 128 * 1024)
    scratch_shapes = [pltpu.VMEM((tb, max_width), jnp.float32)] if use_scratch else []

    w_bytes = sum(w.size * w.dtype.itemsize for w in ws)
    b_bytes = sum(b.size * b.dtype.itemsize for b in bs)
    # Real VMEM footprint: double-buffered x/out tiles + single-buffered weights/biases
    # + activation scratch, with headroom for compiler-internal scratch.
    vmem_bytes = (2 * tb * k0 * 4 + 2 * tb * n_last * 4
                  + w_bytes + b_bytes
                  + (tb * max_width * 4 if use_scratch else 0))
    vmem_limit = min(int(vmem_bytes * 1.5) + (4 << 20), 96 << 20)
    # TODO(synk): for very large L * hidden^2 (> ~half of v7x's 64 MiB VMEM), stream
    # weights per layer (layer grid axis or pltpu.emit_pipeline) instead of keeping the
    # whole stack VMEM-resident.

    cost = pl.CostEstimate(
        flops=2 * b_pad * sum(int(w.shape[0]) * int(w.shape[1]) for w in ws),
        transcendentals=0,
        bytes_accessed=int(x_in.size * 4 + w_bytes + b_bytes + b_pad * n_last * 4),
    )

    kernel = functools.partial(_fused_mlp_kernel,
                               residual_flags=residual_flags,
                               use_scratch=use_scratch)

    # Weights/biases: constant index_map => fetched once and VMEM-resident across all
    # batch tiles; single-buffered so the pipeline doesn't double their footprint.
    w_specs = [pl.BlockSpec(w.shape, lambda i: (0, 0), pipeline_mode=pl.Buffered(1))
               for w in ws]
    b_specs = [pl.BlockSpec(b.shape, lambda i: (0, 0), pipeline_mode=pl.Buffered(1))
               for b in bs]

    out_pad = pl.pallas_call(
        kernel,
        out_shape=jax.ShapeDtypeStruct((b_pad, n_last), jnp.float32),
        grid=(b_pad // tb,),
        in_specs=[pl.BlockSpec((tb, k0), lambda i: (i, 0))] + w_specs + b_specs,
        out_specs=pl.BlockSpec((tb, n_last), lambda i: (i, 0)),
        scratch_shapes=scratch_shapes,
        compiler_params=pltpu.CompilerParams(
            dimension_semantics=("parallel",),
            vmem_limit_bytes=vmem_limit),
        cost_estimate=cost,
    )(x_in, *ws, *bs)

    return out_pad[:B, :packed["out_dim"]]


def init_mlp_params(key, in_dims, out_dims):
    """Deterministic torch.nn.Linear-style init (U[-1/sqrt(fan_in), 1/sqrt(fan_in)])."""
    params = []
    for i, o in zip(in_dims, out_dims):
        key, kw, kb = jax.random.split(key, 3)
        bound = 1.0 / jnp.sqrt(jnp.float32(i))
        # Stored as (in, out): equivalent to torch weight (out, in) transposed.
        w = jax.random.uniform(kw, (i, o), jnp.float32, -bound, bound)
        b = jax.random.uniform(kb, (o,), jnp.float32, -bound, bound)
        params.append({"w": w, "b": b, "residual": (i == o)})
    return params


def _ref_mlp(x, params):
    y = x
    for p in params:
        z = y @ p["w"] + p["b"]
        if p["residual"]:
            z = z + y
        y = jnp.maximum(z, 0.0)
    return y


if __name__ == "__main__":
    key = jax.random.PRNGKey(0)
    k_x, k_x2, k_x3, k_x5, k_p, k_p5 = jax.random.split(key, 6)

    # MLP(in_dims=[32, 64, 64], out_dims=[64, 64, 16])
    #   layer 0: Linear(32 -> 64) + ReLU
    #   layer 1: ResLinear(64 -> 64) + ReLU   (residual branch exercised)
    #   layer 2: Linear(64 -> 16) + ReLU
    in_dims = [32, 64, 64]
    out_dims = [64, 64, 16]
    params = init_mlp_params(k_p, in_dims, out_dims)
    packed = pack_mlp_params(params)                       # one-time packing, reused below

    # 1) Small batch (single grid step).
    batch = 8
    x = jax.random.normal(k_x, (batch, in_dims[0]), jnp.float32)
    out = mlp_forward(x, packed)
    jax.block_until_ready(out)
    ref = _ref_mlp(x, params)
    assert out.shape == (batch, out_dims[-1])
    assert jnp.allclose(out, ref, atol=1e-5, rtol=1e-5)

    # 2) Ragged batch: batch padding + >= 2 grid steps (megacore-friendly).
    batch2 = 300
    x2 = jax.random.normal(k_x2, (batch2, in_dims[0]), jnp.float32)
    out2 = mlp_forward(x2, packed)
    jax.block_until_ready(out2)
    ref2 = _ref_mlp(x2, params)
    assert out2.shape == (batch2, out_dims[-1])
    assert jnp.allclose(out2, ref2, atol=1e-5, rtol=1e-5)

    # 3) Large batch: exercises the big-tile path (tb=512) and the VMEM activation scratch.
    batch3 = 1024
    x3 = jax.random.normal(k_x3, (batch3, in_dims[0]), jnp.float32)
    out3 = mlp_forward(x3, packed)
    jax.block_until_ready(out3)
    ref3 = _ref_mlp(x3, params)
    assert out3.shape == (batch3, out_dims[-1])
    assert jnp.allclose(out3, ref3, atol=1e-5, rtol=1e-5)

    # 4) bf16-weight MXU path (f32 accumulation); looser tolerance by design.
    packed_bf16 = pack_mlp_params(params, use_bf16=True)
    out4 = mlp_forward(x2, packed_bf16)
    jax.block_until_ready(out4)
    assert out4.shape == (batch2, out_dims[-1])
    assert jnp.allclose(out4, ref2, atol=5e-2, rtol=5e-2)

    # 5) ResLinear as the FIRST layer with a non-lane-aligned width (input-pad branch).
    params5 = init_mlp_params(k_p5, [64, 64], [64, 16])
    packed5 = pack_mlp_params(params5)
    x5 = jax.random.normal(k_x5, (16, 64), jnp.float32)
    out5 = mlp_forward(x5, packed5)
    jax.block_until_ready(out5)
    ref5 = _ref_mlp(x5, params5)
    assert out5.shape == (16, 16)
    assert jnp.allclose(out5, ref5, atol=1e-5, rtol=1e-5)

    print("KERNEL_OK")
</pallas_src>

<mosaic_0001>
module attributes {stable_mosaic.version = 11 : i64} {
  func.func @_fused_mlp_kernel(%arg0: i32, %arg1: memref<8x32xf32, #tpu.memory_space<vmem>>, %arg2: memref<32x128xf32, #tpu.memory_space<vmem>>, %arg3: memref<128x128xf32, #tpu.memory_space<vmem>>, %arg4: memref<128x128xf32, #tpu.memory_space<vmem>>, %arg5: memref<1x128xf32, #tpu.memory_space<vmem>>, %arg6: memref<1x128xf32, #tpu.memory_space<vmem>>, %arg7: memref<1x128xf32, #tpu.memory_space<vmem>>, %arg8: memref<8x128xf32, #tpu.memory_space<vmem>>) attributes {dimension_semantics = [#tpu.dimension_semantics<parallel>], iteration_bounds = array<i64: 1>, scalar_prefetch = 0 : i64, scratch_operands = 0 : i64, tpu.core_type = #tpu.core_type<tc>, window_params = [{transform_indices = @transform_0, window_bounds = array<i64: 8, 32>}, {pipeline_mode = #tpu.pipeline_mode<synchronous>, transform_indices = @transform_1, window_bounds = array<i64: 32, 128>}, {pipeline_mode = #tpu.pipeline_mode<synchronous>, transform_indices = @transform_2, window_bounds = array<i64: 128, 128>}, {pipeline_mode = #tpu.pipeline_mode<synchronous>, transform_indices = @transform_3, window_bounds = array<i64: 128, 128>}, {pipeline_mode = #tpu.pipeline_mode<synchronous>, transform_indices = @transform_4, window_bounds = array<i64: 1, 128>}, {pipeline_mode = #tpu.pipeline_mode<synchronous>, transform_indices = @transform_5, window_bounds = array<i64: 1, 128>}, {pipeline_mode = #tpu.pipeline_mode<synchronous>, transform_indices = @transform_6, window_bounds = array<i64: 1, 128>}, {transform_indices = @transform_7, window_bounds = array<i64: 8, 128>}]} {
    %c0 = arith.constant 0 : index
    %c0_0 = arith.constant 0 : index
    %0 = vector.load %arg1[%c0, %c0_0] : memref<8x32xf32, #tpu.memory_space<vmem>>, vector<8x32xf32>
    %c0_1 = arith.constant 0 : index
    %c0_2 = arith.constant 0 : index
    %1 = vector.load %arg2[%c0_1, %c0_2] : memref<32x128xf32, #tpu.memory_space<vmem>>, vector<32x128xf32>
    %cst = arith.constant dense<0.000000e+00> : vector<8x128xf32>
    %2 = tpu.matmul %0, %1, %cst {dimension_numbers = #tpu.dot_dimension_numbers<[1], [0], [0], [1], [0, 0, 1, 1], [], []>} : vector<8x32xf32>, vector<32x128xf32>, vector<8x128xf32> -> vector<8x128xf32>
    %c0_3 = arith.constant 0 : index
    %c0_4 = arith.constant 0 : index
    %3 = vector.load %arg5[%c0_3, %c0_4] : memref<1x128xf32, #tpu.memory_space<vmem>>, vector<1x128xf32>
    %4 = vector.broadcast %3 : vector<1x128xf32> to vector<8x128xf32>
    %5 = arith.addf %2, %4 : vector<8x128xf32>
    %cst_5 = arith.constant 0.000000e+00 : f32
    %6 = vector.broadcast %cst_5 : f32 to vector<8x128xf32>
    %7 = arith.maximumf %5, %6 : vector<8x128xf32>
    %c0_6 = arith.constant 0 : index
    %c0_7 = arith.constant 0 : index
    %8 = vector.load %arg3[%c0_6, %c0_7] : memref<128x128xf32, #tpu.memory_space<vmem>>, vector<128x128xf32>
    %cst_8 = arith.constant dense<0.000000e+00> : vector<8x128xf32>
    %9 = tpu.matmul %7, %8, %cst_8 {dimension_numbers = #tpu.dot_dimension_numbers<[1], [0], [0], [1], [0, 0, 1, 1], [], []>} : vector<8x128xf32>, vector<128x128xf32>, vector<8x128xf32> -> vector<8x128xf32>
    %c0_9 = arith.constant 0 : index
    %c0_10 = arith.constant 0 : index
    %10 = vector.load %arg6[%c0_9, %c0_10] : memref<1x128xf32, #tpu.memory_space<vmem>>, vector<1x128xf32>
    %11 = vector.broadcast %10 : vector<1x128xf32> to vector<8x128xf32>
    %12 = arith.addf %9, %11 : vector<8x128xf32>
    %13 = arith.addf %12, %7 : vector<8x128xf32>
    %cst_11 = arith.constant 0.000000e+00 : f32
    %14 = vector.broadcast %cst_11 : f32 to vector<8x128xf32>
    %15 = arith.maximumf %13, %14 : vector<8x128xf32>
    %c0_12 = arith.constant 0 : index
    %c0_13 = arith.constant 0 : index
    %16 = vector.load %arg4[%c0_12, %c0_13] : memref<128x128xf32, #tpu.memory_space<vmem>>, vector<128x128xf32>
    %cst_14 = arith.constant dense<0.000000e+00> : vector<8x128xf32>
    %17 = tpu.matmul %15, %16, %cst_14 {dimension_numbers = #tpu.dot_dimension_numbers<[1], [0], [0], [1], [0, 0, 1, 1], [], []>} : vector<8x128xf32>, vector<128x128xf32>, vector<8x128xf32> -> vector<8x128xf32>
    %c0_15 = arith.constant 0 : index
    %c0_16 = arith.constant 0 : index
    %18 = vector.load %arg7[%c0_15, %c0_16] : memref<1x128xf32, #tpu.memory_space<vmem>>, vector<1x128xf32>
    %19 = vector.broadcast %18 : vector<1x128xf32> to vector<8x128xf32>
    %20 = arith.addf %17, %19 : vector<8x128xf32>
    %cst_17 = arith.constant 0.000000e+00 : f32
    %21 = vector.broadcast %cst_17 : f32 to vector<8x128xf32>
    %22 = arith.maximumf %20, %21 : vector<8x128xf32>
    %c0_18 = arith.constant 0 : index
    %c0_19 = arith.constant 0 : index
    %23 = vector.load %arg8[%c0_18, %c0_19] : memref<8x128xf32, #tpu.memory_space<vmem>>, vector<8x128xf32>
    tpu.vector_store %arg8[%c0_18, %c0_19], %22 {strides = array<i32>} : memref<8x128xf32, #tpu.memory_space<vmem>>, vector<8x128xf32>,
    return
  }
  func.func @transform_0(%arg0: i32) -> (i32, i32) {
    %c0_i32 = arith.constant 0 : i32
    %c0_i32_0 = arith.constant 0 : i32
    return %arg0, %c0_i32 : i32, i32
  }
  func.func @transform_1(%arg0: i32) -> (i32, i32) {
    %c0_i32 = arith.constant 0 : i32
    %c0_i32_0 = arith.constant 0 : i32
    %c0_i32_1 = arith.constant 0 : i32
    return %c0_i32, %c0_i32_0 : i32, i32
  }
  func.func @transform_2(%arg0: i32) -> (i32, i32) {
    %c0_i32 = arith.constant 0 : i32
    %c0_i32_0 = arith.constant 0 : i32
    %c0_i32_1 = arith.constant 0 : i32
    return %c0_i32, %c0_i32_0 : i32, i32
  }
  func.func @transform_3(%arg0: i32) -> (i32, i32) {
    %c0_i32 = arith.constant 0 : i32
    %c0_i32_0 = arith.constant 0 : i32
    %c0_i32_1 = arith.constant 0 : i32
    return %c0_i32, %c0_i32_0 : i32, i32
  }
  func.func @transform_4(%arg0: i32) -> (i32, i32) {
    %c0_i32 = arith.constant 0 : i32
    %c0_i32_0 = arith.constant 0 : i32
    %c0_i32_1 = arith.constant 0 : i32
    return %c0_i32, %c0_i32_0 : i32, i32
  }
  func.func @transform_5(%arg0: i32) -> (i32, i32) {
    %c0_i32 = arith.constant 0 : i32
    %c0_i32_0 = arith.constant 0 : i32
    %c0_i32_1 = arith.constant 0 : i32
    return %c0_i32, %c0_i32_0 : i32, i32
  }
  func.func @transform_6(%arg0: i32) -> (i32, i32) {
    %c0_i32 = arith.constant 0 : i32
    %c0_i32_0 = arith.constant 0 : i32
    %c0_i32_1 = arith.constant 0 : i32
    return %c0_i32, %c0_i32_0 : i32, i32
  }
  func.func @transform_7(%arg0: i32) -> (i32, i32) {
    %c0_i32 = arith.constant 0 : i32
    %c0_i32_0 = arith.constant 0 : i32
    return %arg0, %c0_i32 : i32, i32
  }
}

</mosaic_0001>

<llo_original>
// kernel: tpu_custom_call.1
$region0: #{tpu_custom_call.1}
  #allocation0 [shape = 'u32[]', space=smem, size = 0x4, offset = 0x4, fixed_abs, tag = 'smem constant byte address 0x4 - core index']
  #allocation1 [shape = 'u32[144,128]{1,0:T(1,128)}', space=vmem, size = 0x12000, scoped, tag = 'internal scratch']
  %s0 = inlined_call_operand.hbm [shape: f32[8,32], index: 0, kind: input, shape index: {}]
  %s1 = inlined_call_operand.hbm [shape: f32[32,128], index: 1, kind: input, shape index: {}]
  %s2 = inlined_call_operand.hbm [shape: f32[128,128], index: 2, kind: input, shape index: {}]
  %s3 = inlined_call_operand.hbm [shape: f32[128,128], index: 3, kind: input, shape index: {}]
  %s4 = inlined_call_operand.vmem [shape: f32[1,128], index: 4, kind: input, shape index: {}]
  %s5 = inlined_call_operand.vmem [shape: f32[1,128], index: 5, kind: input, shape index: {}]
  %s6 = inlined_call_operand.vmem [shape: f32[1,128], index: 6, kind: input, shape index: {}]
  %s7 = inlined_call_operand.hbm [shape: f32[8,128], index: 7, kind: output, shape index: {}]
  %s8 = sld [smem:[#allocation0]]
  $region54: #{tpu_custom_call.1} parent=0
    _
  %s10 = ssub.s32 1, %s8
  %s11 = scalar_select 0, %s10, %s8
  $region1: #{tpu_custom_call.1} parent=0
    #allocation2 [shape = 'u8[4096]{0}', space=vmem, size = 0x1000, scoped, tag = 'input window, operand 0, single buffered']
    #allocation3 [shape = 's32[1]{0}', space=sflag, size = 0x4, scoped, tag = 'scoped memory for tpu_custom_call.1']
    #allocation4 [shape = 's32[1]{0}', space=sflag, size = 0x4, scoped, tag = 'scoped memory for tpu_custom_call.1']
    #allocation5 [shape = 'u8[16384]{0}', space=vmem, size = 0x4000, scoped, tag = 'input window, operand 1, single buffered']
    #allocation6 [shape = 's32[1]{0}', space=sflag, size = 0x4, scoped, tag = 'scoped memory for tpu_custom_call.1']
    #allocation7 [shape = 'u8[65536]{0}', space=vmem, size = 0x10000, scoped, tag = 'input window, operand 2, single buffered']
    #allocation8 [shape = 'u8[65536]{0}', space=vmem, size = 0x10000, scoped, tag = 'input window, operand 3, single buffered']
    #allocation9 [shape = 's32[1]{0}', space=sflag, size = 0x4, scoped, tag = 'scoped memory for tpu_custom_call.1']
    #allocation10 [shape = 'u8[4096]{0}', space=vmem, size = 0x1000, scoped, tag = 'output window, operand 0, single buffered']
    %12 = vsyncpa [#allocation3], 0
    %13 = vsyncpa [#allocation6], 0
    %14 = vsyncpa [#allocation9], 0
    %15 = vsyncpa [#allocation4], 0
    // Predicated region
    $region2: #{tpu_custom_call.1} parent=1 // pred_check
      _
    $region3: #{tpu_custom_call.1} parent=1 // pred_check_branch
      %17 = sbr.rel (0) target = $region5
    $region4: #{tpu_custom_call.1} parent=1 // pred_region
      %s19 = ssub.s32 128, 128
      %20 = vsyncadd [#allocation3], %s19
      %s22 = sshll.u32 [#allocation2], 4
      %s23 = int_to_ptr.vmem [resolvable:$true] %s22
      %25 = dma.hbm_to_vmem [thread:$0]  %s0, 128, %s23, [#allocation3]
    $region5: #{tpu_custom_call.1} parent=1 // pred_fallthru
      _
    // Predicated region
    $region6: #{tpu_custom_call.1} parent=1 // pred_check
      _
    $region7: #{tpu_custom_call.1} parent=1 // pred_check_branch
      %27 = sbr.rel (0) target = $region9
    $region8: #{tpu_custom_call.1} parent=1 // pred_region
      %s29 = ssub.s32 512, 512
      %30 = vsyncadd [#allocation6], %s29
      %s31 = sshll.u32 [#allocation5], 4
      %s32 = int_to_ptr.vmem [resolvable:$true] %s31
      %37 = dma.hbm_to_vmem [thread:$0]  %s1, 512, %s32, [#allocation6], 128, 128, 8
    $region9: #{tpu_custom_call.1} parent=1 // pred_fallthru
      _
    // Predicated region
    $region10: #{tpu_custom_call.1} parent=1 // pred_check
      _
    $region11: #{tpu_custom_call.1} parent=1 // pred_check_branch
      %39 = sbr.rel (0) target = $region13
    $region12: #{tpu_custom_call.1} parent=1 // pred_region
      %s41 = ssub.s32 2048, 2048
      %42 = vsyncadd [#allocation6], %s41
      %s43 = sshll.u32 [#allocation7], 4
      %s44 = int_to_ptr.vmem [resolvable:$true] %s43
      %49 = dma.hbm_to_vmem [thread:$0]  %s2, 2048, %s44, [#allocation6], 128, 128, 8
    $region13: #{tpu_custom_call.1} parent=1 // pred_fallthru
      _
    // Predicated region
    $region14: #{tpu_custom_call.1} parent=1 // pred_check
      _
    $region15: #{tpu_custom_call.1} parent=1 // pred_check_branch
      %51 = sbr.rel (0) target = $region17
    $region16: #{tpu_custom_call.1} parent=1 // pred_region
      %s53 = ssub.s32 2048, 2048
      %54 = vsyncadd [#allocation9], %s53
      %s55 = sshll.u32 [#allocation8], 4
      %s56 = int_to_ptr.vmem [resolvable:$true] %s55
      %61 = dma.hbm_to_vmem [thread:$0]  %s3, 2048, %s56, [#allocation9], 128, 128, 8
    $region17: #{tpu_custom_call.1} parent=1 // pred_fallthru
      _
    // Predicated region
    $region18: #{tpu_custom_call.1} parent=1 // pred_check
      _
    $region19: #{tpu_custom_call.1} parent=1 // pred_check_branch
      %63 = sbr.rel (0) target = $region21
    $region20: #{tpu_custom_call.1} parent=1 // pred_region
      _
    $region21: #{tpu_custom_call.1} parent=1 // pred_fallthru
      _
    // Predicated region
    $region22: #{tpu_custom_call.1} parent=1 // pred_check
      _
    $region23: #{tpu_custom_call.1} parent=1 // pred_check_branch
      %65 = sbr.rel (0) target = $region25
    $region24: #{tpu_custom_call.1} parent=1 // pred_region
      _
    $region25: #{tpu_custom_call.1} parent=1 // pred_fallthru
      _
    // Predicated region
    $region26: #{tpu_custom_call.1} parent=1 // pred_check
      _
    $region27: #{tpu_custom_call.1} parent=1 // pred_check_branch
      %67 = sbr.rel (0) target = $region29
    $region28: #{tpu_custom_call.1} parent=1 // pred_region
      _
    $region29: #{tpu_custom_call.1} parent=1 // pred_fallthru
      _
    // Predicated region
    $region30: #{tpu_custom_call.1} parent=1 // pred_check
      _
    $region31: #{tpu_custom_call.1} parent=1 // pred_check_branch
      %69 = sbr.rel (0) target = $region33
    $region32: #{tpu_custom_call.1} parent=1 // pred_region
      %70 = dma.done [#allocation3], 128
    $region33: #{tpu_custom_call.1} parent=1 // pred_fallthru
      _
    // Predicated region
    $region34: #{tpu_custom_call.1} parent=1 // pred_check
      _
    $region35: #{tpu_custom_call.1} parent=1 // pred_check_branch
      %72 = sbr.rel (0) target = $region37
    $region36: #{tpu_custom_call.1} parent=1 // pred_region
      %73 = dma.done [#allocation6], 512
    $region37: #{tpu_custom_call.1} parent=1 // pred_fallthru
      _
    // Predicated region
    $region38: #{tpu_custom_call.1} parent=1 // pred_check
      _
    $region39: #{tpu_custom_call.1} parent=1 // pred_check_branch
      %75 = sbr.rel (0) target = $region41
    $region40: #{tpu_custom_call.1} parent=1 // pred_region
      %76 = dma.done [#allocation6], 2048
    $region41: #{tpu_custom_call.1} parent=1 // pred_fallthru
      _
    // Predicated region
    $region42: #{tpu_custom_call.1} parent=1 // pred_check
      _
    $region43: #{tpu_custom_call.1} parent=1 // pred_check_branch
      %78 = sbr.rel (0) target = $region45
    $region44: #{tpu_custom_call.1} parent=1 // pred_region
      %79 = dma.done [#allocation9], 2048
    $region45: #{tpu_custom_call.1} parent=1 // pred_fallthru
      _
    %v80 = vld [vmem:[#allocation2] sm:$0xff]
    %v81 = vld [vmem:[#allocation5] sm:$0xff]
    %v82 = vld [vmem:[#allocation5 + $0x8] sm:$0xff]
    %v83 = vld [vmem:[#allocation5 + $0x10] sm:$0xff]
    %v84 = vld [vmem:[#allocation5 + $0x18] sm:$0xff]
    %v85 = vld [vmem:[%s4] sm:$0x1]
    %v87 = vlaneseq
    %v88 = vshrl.u32 %v87, 7
    %v89 = vsub.s32 0, %v88
    %v90 = vrot.slane %v85, %v89
    %vm92 = vcmask 261120
    %v94 = vsel %vm92, %v80, 0
    %96 = vmatprep.subr.mxu0 0.0
    %97 = vmatpush1.msra.mxu0 0.0
    %98 = vmatprep.subr.mxu0 0.0
    %99 = vmatpush1.msra.mxu0 0.0
    %100 = vmatprep.subr.mxu0 0.0
    %101 = vmatpush1.msra.mxu0 0.0
    %102 = vmatprep.subr.mxu0 0.0
    %103 = vmatpush1.msra.mxu0 0.0
    %104 = vmatprep.subr.mxu0 0.0
    %105 = vmatpush1.msra.mxu0 0.0
    %106 = vmatprep.subr.mxu0 0.0
    %107 = vmatpush1.msra.mxu0 0.0
    %108 = vmatprep.subr.mxu0 0.0
    %109 = vmatpush1.msra.mxu0 0.0
    %110 = vmatprep.subr.mxu0 0.0
    %111 = vmatpush1.msra.mxu0 0.0
    %112 = vmatprep.subr.mxu0 0.0
    %113 = vmatpush1.msra.mxu0 0.0
    %114 = vmatprep.subr.mxu0 0.0
    %115 = vmatpush1.msra.mxu0 0.0
    %116 = vmatprep.subr.mxu0 0.0
    %117 = vmatpush1.msra.mxu0 0.0
    %118 = vmatprep.subr.mxu0 0.0
    %119 = vmatpush1.msra.mxu0 0.0
    %120 = vmatprep.subr.mxu0 0.0
    %121 = vmatpush1.msra.mxu0 %v84
    %122 = vmatprep.subr.mxu0 0.0
    %123 = vmatpush1.msra.mxu0 %v83
    %124 = vmatprep.subr.mxu0 0.0
    %125 = vmatpush1.msra.mxu0 %v82
    %126 = vmatprep.subr.mxu0 0.0
    %127 = vmatpush1.msra.mxu0 %v81
    %128 = vmatprep.subr.mxu0 0.0
    %129 = vmatpush2.msra.mxu0 0.0
    %130 = vmatprep.subr.mxu0 0.0
    %131 = vmatpush2.msra.mxu0 0.0
    %132 = vmatprep.subr.mxu0 0.0
    %133 = vmatpush2.msra.mxu0 0.0
    %134 = vmatprep.subr.mxu0 0.0
    %135 = vmatpush2.msra.mxu0 0.0
    %136 = vmatprep.subr.mxu0 0.0
    %137 = vmatpush2.msra.mxu0 0.0
    %138 = vmatprep.subr.mxu0 0.0
    %139 = vmatpush2.msra.mxu0 0.0
    %140 = vmatprep.subr.mxu0 0.0
    %141 = vmatpush2.msra.mxu0 0.0
    %142 = vmatprep.subr.mxu0 0.0
    %143 = vmatpush2.msra.mxu0 0.0
    %144 = vmatprep.subr.mxu0 0.0
    %145 = vmatpush2.msra.mxu0 0.0
    %146 = vmatprep.subr.mxu0 0.0
    %147 = vmatpush2.msra.mxu0 0.0
    %148 = vmatprep.subr.mxu0 0.0
    %149 = vmatpush2.msra.mxu0 0.0
    %150 = vmatprep.subr.mxu0 0.0
    %151 = vmatpush2.msra.mxu0 0.0
    %152 = vmatprep.subr.mxu0 0.0
    %153 = vmatpush2.msra.mxu0 0.0
    %154 = vmatprep.subr.mxu0 0.0
    %155 = vmatpush2.msra.mxu0 0.0
    %156 = vmatprep.subr.mxu0 0.0
    %157 = vmatpush2.msra.mxu0 0.0
    %158 = vmatprep.subr.mxu0 0.0
    %159 = vmatpush2.msra.mxu0 0.0
    %160 = vmatprep.mubr.f32.mxu0 0.0
    %161 = vmatmul.mubr.f32.gmra.mxu0 %v94
    %v162 = vpop.f32.mrf.mxu0
    %v163 = vadd.f32 %v90, %v162
    %v164 = vpop.f32.mrf.mxu0
    %165 = vdwg.mxu0
    %v166 = vmax.f32 %v163, 0.0
    %v167 = vld [vmem:[#allocation7] sm:$0xff]
    %v168 = vld [vmem:[#allocation7 + $0x8] sm:$0xff]
    %v169 = vld [vmem:[#allocation7 + $0x10] sm:$0xff]
    %v170 = vld [vmem:[#allocation7 + $0x18] sm:$0xff]
    %v171 = vld [vmem:[#allocation7 + $0x20] sm:$0xff]
    %v172 = vld [vmem:[#allocation7 + $0x28] sm:$0xff]
    %v173 = vld [vmem:[#allocation7 + $0x30] sm:$0xff]
    %v174 = vld [vmem:[#allocation7 + $0x38] sm:$0xff]
    %v175 = vld [vmem:[#allocation7 + $0x40] sm:$0xff]
    %v176 = vld [vmem:[#allocation7 + $0x48] sm:$0xff]
    %v177 = vld [vmem:[#allocation7 + $0x50] sm:$0xff]
    %v178 = vld [vmem:[#allocation7 + $0x58] sm:$0xff]
    %v179 = vld [vmem:[#allocation7 + $0x60] sm:$0xff]
    %v180 = vld [vmem:[#allocation7 + $0x68] sm:$0xff]
    %v181 = vld [vmem:[#allocation7 + $0x70] sm:$0xff]
    %v182 = vld [vmem:[#allocation7 + $0x78] sm:$0xff]
    %v183 = vld [vmem:[%s5] sm:$0x1]
    %v185 = vlaneseq
    %v186 = vshrl.u32 %v185, 7
    %v187 = vsub.s32 0, %v186
    %v188 = vrot.slane %v183, %v187
    %190 = vmatprep.subr.mxu0 0.0
    %191 = vmatpush1.msra.mxu0 %v182
    %192 = vmatprep.subr.mxu0 0.0
    %193 = vmatpush1.msra.mxu0 %v181
    %194 = vmatprep.subr.mxu0 0.0
    %195 = vmatpush1.msra.mxu0 %v180
    %196 = vmatprep.subr.mxu0 0.0
    %197 = vmatpush1.msra.mxu0 %v179
    %198 = vmatprep.subr.mxu0 0.0
    %199 = vmatpush1.msra.mxu0 %v178
    %200 = vmatprep.subr.mxu0 0.0
    %201 = vmatpush1.msra.mxu0 %v177
    %202 = vmatprep.subr.mxu0 0.0
    %203 = vmatpush1.msra.mxu0 %v176
    %204 = vmatprep.subr.mxu0 0.0
    %205 = vmatpush1.msra.mxu0 %v175
    %206 = vmatprep.subr.mxu0 0.0
    %207 = vmatpush1.msra.mxu0 %v174
    %208 = vmatprep.subr.mxu0 0.0
    %209 = vmatpush1.msra.mxu0 %v173
    %210 = vmatprep.subr.mxu0 0.0
    %211 = vmatpush1.msra.mxu0 %v172
    %212 = vmatprep.subr.mxu0 0.0
    %213 = vmatpush1.msra.mxu0 %v171
    %214 = vmatprep.subr.mxu0 0.0
    %215 = vmatpush1.msra.mxu0 %v170
    %216 = vmatprep.subr.mxu0 0.0
    %217 = vmatpush1.msra.mxu0 %v169
    %218 = vmatprep.subr.mxu0 0.0
    %219 = vmatpush1.msra.mxu0 %v168
    %220 = vmatprep.subr.mxu0 0.0
    %221 = vmatpush1.msra.mxu0 %v167
    %222 = vmatprep.subr.mxu0 0.0
    %223 = vmatpush2.msra.mxu0 0.0
    %224 = vmatprep.subr.mxu0 0.0
    %225 = vmatpush2.msra.mxu0 0.0
    %226 = vmatprep.subr.mxu0 0.0
    %227 = vmatpush2.msra.mxu0 0.0
    %228 = vmatprep.subr.mxu0 0.0
    %229 = vmatpush2.msra.mxu0 0.0
    %230 = vmatprep.subr.mxu0 0.0
    %231 = vmatpush2.msra.mxu0 0.0
    %232 = vmatprep.subr.mxu0 0.0
    %233 = vmatpush2.msra.mxu0 0.0
    %234 = vmatprep.subr.mxu0 0.0
    %235 = vmatpush2.msra.mxu0 0.0
    %236 = vmatprep.subr.mxu0 0.0
    %237 = vmatpush2.msra.mxu0 0.0
    %238 = vmatprep.subr.mxu0 0.0
    %239 = vmatpush2.msra.mxu0 0.0
    %240 = vmatprep.subr.mxu0 0.0
    %241 = vmatpush2.msra.mxu0 0.0
    %242 = vmatprep.subr.mxu0 0.0
    %243 = vmatpush2.msra.mxu0 0.0
    %244 = vmatprep.subr.mxu0 0.0
    %245 = vmatpush2.msra.mxu0 0.0
    %246 = vmatprep.subr.mxu0 0.0
    %247 = vmatpush2.msra.mxu0 0.0
    %248 = vmatprep.subr.mxu0 0.0
    %249 = vmatpush2.msra.mxu0 0.0
    %250 = vmatprep.subr.mxu0 0.0
    %251 = vmatpush2.msra.mxu0 0.0
    %252 = vmatprep.subr.mxu0 0.0
    %253 = vmatpush2.msra.mxu0 0.0
    %254 = vmatprep.mubr.f32.mxu0 0.0
    %255 = vmatmul.mubr.f32.gmra.mxu0 %v166
    %v256 = vpop.f32.mrf.mxu0
    %v257 = vadd.f32 %v188, %v256
    %v258 = vpop.f32.mrf.mxu0
    %259 = vdwg.mxu0
    %v260 = vadd.f32 %v257, %v166
    %v261 = vmax.f32 %v260, 0.0
    %v262 = vld [vmem:[#allocation8] sm:$0xff]
    %v263 = vld [vmem:[#allocation8 + $0x8] sm:$0xff]
    %v264 = vld [vmem:[#allocation8 + $0x10] sm:$0xff]
    %v265 = vld [vmem:[#allocation8 + $0x18] sm:$0xff]
    %v266 = vld [vmem:[#allocation8 + $0x20] sm:$0xff]
    %v267 = vld [vmem:[#allocation8 + $0x28] sm:$0xff]
    %v268 = vld [vmem:[#allocation8 + $0x30] sm:$0xff]
    %v269 = vld [vmem:[#allocation8 + $0x38] sm:$0xff]
    %v270 = vld [vmem:[#allocation8 + $0x40] sm:$0xff]
    %v271 = vld [vmem:[#allocation8 + $0x48] sm:$0xff]
    %v272 = vld [vmem:[#allocation8 + $0x50] sm:$0xff]
    %v273 = vld [vmem:[#allocation8 + $0x58] sm:$0xff]
    %v274 = vld [vmem:[#allocation8 + $0x60] sm:$0xff]
    %v275 = vld [vmem:[#allocation8 + $0x68] sm:$0xff]
    %v276 = vld [vmem:[#allocation8 + $0x70] sm:$0xff]
    %v277 = vld [vmem:[#allocation8 + $0x78] sm:$0xff]
    %v278 = vld [vmem:[%s6] sm:$0x1]
    %v280 = vlaneseq
    %v281 = vshrl.u32 %v280, 7
    %v282 = vsub.s32 0, %v281
    %v283 = vrot.slane %v278, %v282
    %285 = vmatprep.subr.mxu0 0.0
    %286 = vmatpush1.msra.mxu0 %v277
    %287 = vmatprep.subr.mxu0 0.0
    %288 = vmatpush1.msra.mxu0 %v276
    %289 = vmatprep.subr.mxu0 0.0
    %290 = vmatpush1.msra.mxu0 %v275
    %291 = vmatprep.subr.mxu0 0.0
    %292 = vmatpush1.msra.mxu0 %v274
    %293 = vmatprep.subr.mxu0 0.0
    %294 = vmatpush1.msra.mxu0 %v273
    %295 = vmatprep.subr.mxu0 0.0
    %296 = vmatpush1.msra.mxu0 %v272
    %297 = vmatprep.subr.mxu0 0.0
    %298 = vmatpush1.msra.mxu0 %v271
    %299 = vmatprep.subr.mxu0 0.0
    %300 = vmatpush1.msra.mxu0 %v270
    %301 = vmatprep.subr.mxu0 0.0
    %302 = vmatpush1.msra.mxu0 %v269
    %303 = vmatprep.subr.mxu0 0.0
    %304 = vmatpush1.msra.mxu0 %v268
    %305 = vmatprep.subr.mxu0 0.0
    %306 = vmatpush1.msra.mxu0 %v267
    %307 = vmatprep.subr.mxu0 0.0
    %308 = vmatpush1.msra.mxu0 %v266
    %309 = vmatprep.subr.mxu0 0.0
    %310 = vmatpush1.msra.mxu0 %v265
    %311 = vmatprep.subr.mxu0 0.0
    %312 = vmatpush1.msra.mxu0 %v264
    %313 = vmatprep.subr.mxu0 0.0
    %314 = vmatpush1.msra.mxu0 %v263
    %315 = vmatprep.subr.mxu0 0.0
    %316 = vmatpush1.msra.mxu0 %v262
    %317 = vmatprep.subr.mxu0 0.0
    %318 = vmatpush2.msra.mxu0 0.0
    %319 = vmatprep.subr.mxu0 0.0
    %320 = vmatpush2.msra.mxu0 0.0
    %321 = vmatprep.subr.mxu0 0.0
    %322 = vmatpush2.msra.mxu0 0.0
    %323 = vmatprep.subr.mxu0 0.0
    %324 = vmatpush2.msra.mxu0 0.0
    %325 = vmatprep.subr.mxu0 0.0
    %326 = vmatpush2.msra.mxu0 0.0
    %327 = vmatprep.subr.mxu0 0.0
    %328 = vmatpush2.msra.mxu0 0.0
    %329 = vmatprep.subr.mxu0 0.0
    %330 = vmatpush2.msra.mxu0 0.0
    %331 = vmatprep.subr.mxu0 0.0
    %332 = vmatpush2.msra.mxu0 0.0
    %333 = vmatprep.subr.mxu0 0.0
    %334 = vmatpush2.msra.mxu0 0.0
    %335 = vmatprep.subr.mxu0 0.0
    %336 = vmatpush2.msra.mxu0 0.0
    %337 = vmatprep.subr.mxu0 0.0
    %338 = vmatpush2.msra.mxu0 0.0
    %339 = vmatprep.subr.mxu0 0.0
    %340 = vmatpush2.msra.mxu0 0.0
    %341 = vmatprep.subr.mxu0 0.0
    %342 = vmatpush2.msra.mxu0 0.0
    %343 = vmatprep.subr.mxu0 0.0
    %344 = vmatpush2.msra.mxu0 0.0
    %345 = vmatprep.subr.mxu0 0.0
    %346 = vmatpush2.msra.mxu0 0.0
    %347 = vmatprep.subr.mxu0 0.0
    %348 = vmatpush2.msra.mxu0 0.0
    %349 = vmatprep.mubr.f32.mxu0 0.0
    %350 = vmatmul.mubr.f32.gmra.mxu0 %v261
    %v351 = vpop.f32.mrf.mxu0
    %v352 = vadd.f32 %v283, %v351
    %v353 = vpop.f32.mrf.mxu0
    %354 = vdwg.mxu0
    %v355 = vmax.f32 %v352, 0.0
    %356 = vst [vmem:[#allocation10] sm:$0xff] %v355
    // Predicated region
    $region46: #{tpu_custom_call.1} parent=1 // pred_check
      _
    $region47: #{tpu_custom_call.1} parent=1 // pred_check_branch
      %358 = sbr.rel (0) target = $region49
    $region48: #{tpu_custom_call.1} parent=1 // pred_region
      %s360 = ssub.s32 128, 128
      %361 = vsyncadd [#allocation4], %s360
      %s363 = sshll.u32 [#allocation10], 4
      %s364 = int_to_ptr.vmem [resolvable:$true] %s363
      %366 = dma.vmem_to_hbm [thread:$0]  %s364, 128, %s7, [#allocation4]
    $region49: #{tpu_custom_call.1} parent=1 // pred_fallthru
      _
    // Predicated region
    $region50: #{tpu_custom_call.1} parent=1 // pred_check
      _
    $region51: #{tpu_custom_call.1} parent=1 // pred_check_branch
      %368 = sbr.rel (0) target = $region53
    $region52: #{tpu_custom_call.1} parent=1 // pred_region
      %369 = dma.done [#allocation4], 128
    $region53: #{tpu_custom_call.1} parent=1 // pred_fallthru
      _
    %370 = vsyncpa [#allocation3], 1
    %371 = vsyncpa [#allocation6], 1
    %372 = vsyncpa [#allocation9], 1
    %373 = vsyncpa [#allocation4], 1

</llo_original>
